<compile_context>
chip_gen: v7x
topology: tpu7x:2x2x1
jax: 0.10.0
libtpu: 0.0.40
codegen_flags: <defaults>
</compile_context>

<pallas_src>
import functools

import jax
import jax.numpy as jnp
from jax.experimental import pallas as pl
from jax.experimental.pallas import tpu as pltpu

LANE = 128                         # points packed per lane-dense row
XYZ = 3                            # columns the kernel touches (x, y, z)
MAX_BLK_SUB = 1024                 # sublane rows per grid step (131072 pts/step)
DEFAULT_XLA_FALLBACK_PTS = 1 << 16 # below this, plain XLA slice+sub is faster


def _make_shift_kernel(off0, off1, off2):
    """out = pts - [off0, off1, off2] tiled across the lane-dense row.

    Offsets are static Python floats baked in as splats; the per-column
    selection is rebuilt with iota/select (pure VPU work, huge slack here),
    so there is no extra offset input stream / DMA.
    """
    def kernel(pts_ref, out_ref):
        # Lane-dense row layout is [x0,y0,z0, x1,y1,z1, ..., x127,y127,z127].
        col = jax.lax.broadcasted_iota(jnp.int32, out_ref.shape, 1) % XYZ
        off = jnp.where(col == 0, off0, jnp.where(col == 1, off1, off2))
        out_ref[...] = pts_ref[...] - off.astype(out_ref.dtype)
    return kernel


def _pick_blk_sub(n128):
    """Sublane rows per block: full extent for tiny inputs, otherwise a
    multiple of 8, capped at MAX_BLK_SUB, chosen so the grid has >= 2 blocks
    (lets both v7x TensorCores participate)."""
    if n128 <= 8:
        return n128
    half = -(-n128 // 2)          # ceil(n128 / 2)
    half = -(-half // 8) * 8      # round up to sublane multiple
    return min(MAX_BLK_SUB, half)


@functools.partial(jax.jit, static_argnames=("off",))
def _xyz_pallas(pt_features, off):
    """Fused: [:, :3] slice -> pad to 128-row multiple -> lane-dense view ->
    Pallas broadcast-subtract -> row trim. One jit so XLA fuses the prep."""
    n_total = pt_features.shape[0]
    n128 = -(-n_total // LANE)
    n_pad = n128 * LANE
    lanes = XYZ * LANE

    xyz_cols = pt_features[:, :XYZ]
    xyz_padded = jnp.pad(xyz_cols, ((0, n_pad - n_total), (0, 0)))
    xyz_ld = xyz_padded.reshape(n128, lanes)

    blk_sub = _pick_blk_sub(n128)
    grid = (pl.cdiv(n128, blk_sub),)

    shifted_ld = pl.pallas_call(
        _make_shift_kernel(off[0], off[1], off[2]),
        out_shape=jax.ShapeDtypeStruct((n128, lanes), xyz_ld.dtype),
        grid_spec=pltpu.PrefetchScalarGridSpec(
            num_scalar_prefetch=0,
            grid=grid,
            in_specs=[pl.BlockSpec((blk_sub, lanes), lambda i: (i, 0))],
            out_specs=pl.BlockSpec((blk_sub, lanes), lambda i: (i, 0)),
        ),
        compiler_params=pltpu.CompilerParams(
            dimension_semantics=("parallel",),
        ),
    )(xyz_ld)

    # Cheap row trim back to (N, 3); no column slicing / C-wide re-read.
    return shifted_ld.reshape(n_pad, XYZ)[:n_total]


@functools.partial(jax.jit, static_argnames=("off",))
def _xyz_xla(pt_features, off):
    # Small-N path: one fused slice + subtract pass.
    return pt_features[:, :XYZ] - jnp.asarray(off, dtype=pt_features.dtype)


def identity_forward(example, pc_range, *,
                     min_points_for_pallas=DEFAULT_XLA_FALLBACK_PTS):
    """Pallas/JAX port of det3d Identity.forward.

    example: dict with key 'points' -> list of (N_i, C) float32 arrays (C >= 3).
    pc_range: sequence of >= 3 floats.
    """
    points_list = example.pop("points")
    C = points_list[0].shape[1]
    assert C >= XYZ, "Identity reader expects at least x, y, z columns"
    assert all(p.shape[1] == C for p in points_list), "heterogeneous column counts"

    xyz_batch_cnt = jnp.asarray([p.shape[0] for p in points_list], dtype=jnp.int32)
    pt_features = (
        jnp.concatenate(points_list, axis=0) if len(points_list) > 1 else points_list[0]
    )
    n_total = pt_features.shape[0]

    off = (float(pc_range[0]), float(pc_range[1]), float(pc_range[2]))

    if n_total < min_points_for_pallas:
        xyz = _xyz_xla(pt_features, off)
    else:
        xyz = _xyz_pallas(pt_features, off)

    example["xyz"] = xyz
    example["pt_features"] = pt_features
    example["xyz_batch_cnt"] = xyz_batch_cnt
    return example


if __name__ == "__main__":
    key = jax.random.PRNGKey(0)
    k1, k2, k3, k4 = jax.random.split(key, 4)

    pc_range = [-51.2, -51.2, -5.0, 51.2, 51.2, 3.0]
    off_ref = jnp.asarray(pc_range[:3], dtype=jnp.float32)

    # ---- Case 1: small clouds (batch=2, C=5), force the Pallas path ----------
    pts0 = jax.random.uniform(k1, (64, 5), dtype=jnp.float32, minval=-50.0, maxval=50.0)
    pts1 = jax.random.uniform(k2, (48, 5), dtype=jnp.float32, minval=-50.0, maxval=50.0)

    example = {"points": [pts0, pts1], "metadata": "unchanged"}
    out = identity_forward(example, pc_range, min_points_for_pallas=0)  # force Pallas
    jax.block_until_ready(out["xyz"])
    jax.block_until_ready(out["pt_features"])
    jax.block_until_ready(out["xyz_batch_cnt"])

    all_pts = jnp.concatenate([pts0, pts1], axis=0)
    ref_xyz = all_pts[:, :3] - off_ref
    assert out["xyz"].shape == (112, 3)
    assert out["pt_features"].shape == (112, 5)
    assert out["xyz_batch_cnt"].shape == (2,)
    assert jnp.allclose(out["xyz"], ref_xyz, atol=1e-5)
    assert jnp.allclose(out["pt_features"], all_pts)
    assert jnp.array_equal(out["xyz_batch_cnt"], jnp.array([64, 48], dtype=jnp.int32))
    assert "metadata" in example and "points" not in example  # dict semantics preserved

    # Auto path on the same small input uses the fused-XLA fallback; same result.
    out_auto = identity_forward({"points": [pts0, pts1]}, pc_range)
    jax.block_until_ready(out_auto["xyz"])
    assert jnp.allclose(out_auto["xyz"], ref_xyz, atol=1e-5)

    # ---- Case 2: multi-block grid with a ragged last block (Pallas path) -----
    pts2 = jax.random.uniform(k3, (2304, 5), dtype=jnp.float32, minval=-50.0, maxval=50.0)
    pts3 = jax.random.uniform(k4, (1280, 5), dtype=jnp.float32, minval=-50.0, maxval=50.0)
    ex2 = {"points": [pts2, pts3]}
    out2 = identity_forward(ex2, pc_range, min_points_for_pallas=0)
    jax.block_until_ready(out2["xyz"])
    ref2 = jnp.concatenate([pts2, pts3], axis=0)[:, :3] - off_ref
    assert out2["xyz"].shape == (3584, 3)
    assert jnp.allclose(out2["xyz"], ref2, atol=1e-5)
    assert jnp.array_equal(out2["xyz_batch_cnt"], jnp.array([2304, 1280], dtype=jnp.int32))

    print("KERNEL_OK")
</pallas_src>

<mosaic_0001>
module attributes {stable_mosaic.version = 11 : i64} {
  func.func @kernel(%arg0: i32, %arg1: memref<1x384xf32, #tpu.memory_space<vmem>>, %arg2: memref<1x384xf32, #tpu.memory_space<vmem>>) attributes {dimension_semantics = [#tpu.dimension_semantics<parallel>], iteration_bounds = array<i64: 1>, scalar_prefetch = 0 : i64, scratch_operands = 0 : i64, tpu.core_type = #tpu.core_type<tc>, window_params = [{transform_indices = @transform_0, window_bounds = array<i64: 1, 384>}, {transform_indices = @transform_1, window_bounds = array<i64: 1, 384>}]} {
    %0 = tpu.iota {dimensions = array<i32: 1>} : vector<1x384xi32>
    %c3_i32 = arith.constant 3 : i32
    %c0_i32 = arith.constant 0 : i32
    %1 = arith.cmpi eq, %c3_i32, %c0_i32 : i32
    %c1_i32 = arith.constant 1 : i32
    %2 = arith.select %1, %c1_i32, %c3_i32 : i32
    %3 = vector.broadcast %2 : i32 to vector<1x384xi32>
    %4 = arith.remsi %0, %3 : vector<1x384xi32>
    %c0_i32_0 = arith.constant 0 : i32
    %5 = vector.broadcast %c0_i32_0 : i32 to vector<1x384xi32>
    %6 = arith.cmpi ne, %4, %5 : vector<1x384xi32>
    %c0_i32_1 = arith.constant 0 : i32
    %7 = vector.broadcast %c0_i32_1 : i32 to vector<1x384xi32>
    %8 = arith.cmpi slt, %4, %7 : vector<1x384xi32>
    %c0_i32_2 = arith.constant 0 : i32
    %9 = arith.cmpi slt, %2, %c0_i32_2 : i32
    %10 = vector.broadcast %9 : i1 to vector<1x384xi1>
    %11 = vector.broadcast %10 : vector<1x384xi1> to vector<1x384xi1>
    %12 = arith.xori %8, %11 : vector<1x384xi1>
    %13 = arith.andi %12, %6 : vector<1x384xi1>
    %14 = vector.broadcast %2 : i32 to vector<1x384xi32>
    %15 = arith.addi %4, %14 : vector<1x384xi32>
    %16 = arith.select %13, %15, %4 : vector<1x384xi1>, vector<1x384xi32>
    %c0_i32_3 = arith.constant 0 : i32
    %17 = vector.broadcast %c0_i32_3 : i32 to vector<1x384xi32>
    %18 = arith.cmpi eq, %16, %17 : vector<1x384xi32>
    %c1_i32_4 = arith.constant 1 : i32
    %19 = vector.broadcast %c1_i32_4 : i32 to vector<1x384xi32>
    %20 = arith.cmpi eq, %16, %19 : vector<1x384xi32>
    %cst = arith.constant -5.120000e+01 : f32
    %cst_5 = arith.constant -5.000000e+00 : f32
    %21 = vector.broadcast %cst : f32 to vector<1x384xf32>
    %22 = vector.broadcast %cst_5 : f32 to vector<1x384xf32>
    %23 = arith.select %20, %21, %22 : vector<1x384xi1>, vector<1x384xf32>
    %cst_6 = arith.constant -5.120000e+01 : f32
    %24 = vector.broadcast %cst_6 : f32 to vector<1x384xf32>
    %25 = arith.select %18, %24, %23 : vector<1x384xi1>, vector<1x384xf32>
    %c0 = arith.constant 0 : index
    %c0_7 = arith.constant 0 : index
    %26 = vector.load %arg1[%c0, %c0_7] : memref<1x384xf32, #tpu.memory_space<vmem>>, vector<1x384xf32>
    %27 = arith.subf %26, %25 : vector<1x384xf32>
    %c0_8 = arith.constant 0 : index
    %c0_9 = arith.constant 0 : index
    %28 = vector.load %arg2[%c0_8, %c0_9] : memref<1x384xf32, #tpu.memory_space<vmem>>, vector<1x384xf32>
    tpu.vector_store %arg2[%c0_8, %c0_9], %27 {strides = array<i32>} : memref<1x384xf32, #tpu.memory_space<vmem>>, vector<1x384xf32>,
    return
  }
  func.func @transform_0(%arg0: i32) -> (i32, i32) {
    %c0_i32 = arith.constant 0 : i32
    %c0_i32_0 = arith.constant 0 : i32
    return %arg0, %c0_i32 : i32, i32
  }
  func.func @transform_1(%arg0: i32) -> (i32, i32) {
    %c0_i32 = arith.constant 0 : i32
    %c0_i32_0 = arith.constant 0 : i32
    return %arg0, %c0_i32 : i32, i32
  }
}

</mosaic_0001>

<llo_original>
// kernel: _xyz_pallas.1
$region0: #{_xyz_pallas.1}
  #allocation0 [shape = 'u32[]', space=smem, size = 0x4, offset = 0x4, fixed_abs, tag = 'smem constant byte address 0x4 - core index']
  #allocation1 [shape = 'u32[144,128]{1,0:T(1,128)}', space=vmem, size = 0x12000, scoped, tag = 'internal scratch']
  %s0 = inlined_call_operand.vmem [shape: f32[1,384], index: 0, kind: input, shape index: {}]
  %s1 = inlined_call_operand.vmem [shape: f32[1,384], index: 1, kind: output, shape index: {}]
  %s2 = sld [smem:[#allocation0]]
  $region14: #{_xyz_pallas.1} parent=0
    _
  %s4 = ssub.s32 1, %s2
  %s5 = scalar_select 0, %s4, %s2
  // Predicated region
  $region2: #{_xyz_pallas.1} parent=0 // pred_check
    _
  $region3: #{_xyz_pallas.1} parent=0 // pred_check_branch
    %7 = sbr.rel (0) target = $region5
  $region4: #{_xyz_pallas.1} parent=0 // pred_region
    _
  $region5: #{_xyz_pallas.1} parent=0 // pred_fallthru
    _
  %v8 = vlaneseq
  %v9 = vand.u32 %v8, 127
  %v10 = vadd.s32 %v9, 128
  %v11 = vadd.s32 %v9, 256
  %vm12 = vcmp.lt.s32.totalorder %v9, 0
  %v13 = vsub.s32 0, %v9
  %v14 = vsel %vm12, %v13, %v9
  %v15 = vmul.u32.u64.compose %v14, 2863311531
  %v16 = vextract.low.u32 %v15
  %v17 = vextract.high.u32 %v15
  %v18 = vshrl.u32 %v17, 1
  %v19 = vmul.u32 %v18, 3
  %v20 = vsub.s32 %v14, %v19
  %v21 = vsub.s32 0, %v20
  %v22 = vsel %vm12, %v21, %v20
  %vm23 = vcmp.lt.s32.totalorder %v10, 0
  %v24 = vsub.s32 0, %v10
  %v25 = vsel %vm23, %v24, %v10
  %v26 = vmul.u32.u64.compose %v25, 2863311531
  %v27 = vextract.low.u32 %v26
  %v28 = vextract.high.u32 %v26
  %v29 = vshrl.u32 %v28, 1
  %v30 = vmul.u32 %v29, 3
  %v31 = vsub.s32 %v25, %v30
  %v32 = vsub.s32 0, %v31
  %v33 = vsel %vm23, %v32, %v31
  %vm34 = vcmp.lt.s32.totalorder %v11, 0
  %v35 = vsub.s32 0, %v11
  %v36 = vsel %vm34, %v35, %v11
  %v37 = vmul.u32.u64.compose %v36, 2863311531
  %v38 = vextract.low.u32 %v37
  %v39 = vextract.high.u32 %v37
  %v40 = vshrl.u32 %v39, 1
  %v41 = vmul.u32 %v40, 3
  %v42 = vsub.s32 %v36, %v41
  %v43 = vsub.s32 0, %v42
  %v44 = vsel %vm34, %v43, %v42
  %vm45 = vcmp.ne.s32.totalorder %v22, 0
  %vm46 = vcmp.ne.s32.totalorder %v33, 0
  %vm47 = vcmp.ne.s32.totalorder %v44, 0
  %vm48 = vcmp.lt.s32.totalorder %v22, 0
  %vm49 = vcmp.lt.s32.totalorder %v33, 0
  %vm50 = vcmp.lt.s32.totalorder %v44, 0
  %vm51 = vmand %vm48, %vm45
  %vm52 = vmand %vm49, %vm46
  %vm53 = vmand %vm50, %vm47
  %v54 = vadd.s32 %v22, 3
  %v55 = vadd.s32 %v33, 3
  %v56 = vadd.s32 %v44, 3
  %v57 = vsel %vm51, %v54, %v22
  %v58 = vsel %vm52, %v55, %v33
  %v59 = vsel %vm53, %v56, %v44
  %vm60 = vcmp.eq.s32.totalorder %v57, 0
  %vm61 = vcmp.eq.s32.totalorder %v58, 0
  %vm62 = vcmp.eq.s32.totalorder %v59, 0
  %vm63 = vcmp.eq.s32.totalorder %v57, 1
  %vm64 = vcmp.eq.s32.totalorder %v58, 1
  %vm65 = vcmp.eq.s32.totalorder %v59, 1
  %v66 = vsel %vm63, -51.2, -5.0
  %v67 = vsel %vm64, -51.2, -5.0
  %v68 = vsel %vm65, -51.2, -5.0
  %v69 = vsel %vm60, -51.2, %v66
  %v70 = vsel %vm61, -51.2, %v67
  %v71 = vsel %vm62, -51.2, %v68
  %v72 = vld [vmem:[%s0] sm:$0x7]
  %v76 = vcombine.low %v69, %v70
  %v78 = vunpack.c.l.s4 1966171168
  %v79 = vunpack.c.0.s8 %v78
  %v80 = vlaneseq
  %v81 = vshrl.u32 %v80, 7
  %v82 = vsub.s32 %v79, %v81
  %v83 = vrot.slane %v76, %v82
  %v85 = vunpack.c.l.s4 1966171168
  %v86 = vunpack.c.0.s8 %v85
  %v87 = vlaneseq
  %v88 = vshrl.u32 %v87, 7
  %v89 = vsub.s32 %v86, %v88
  %v90 = vrot.slane %v71, %v89
  %v91 = vcombine.low %v83, %v90
  %v93 = vunpack.c.l.s4 1966171168
  %v94 = vunpack.c.0.s8 %v93
  %v95 = vlaneseq
  %v96 = vshrl.u32 %v95, 7
  %v97 = vsub.s32 %v94, %v96
  %v98 = vrot.slane %v91, %v97
  %v100 = vsub.f32 %v72, %v98
  %v101 = vlaneseq
  %vm102 = vcmp.ge.s32.totalorder %v101, 0
  %vm103 = vcmp.lt.s32.totalorder %v101, 384
  %vm104 = vmand %vm102, %vm103
  %105 = vst.msk [vmem:[%s1] sm:$0x7] %vm104, %v100
  // Predicated region
  $region6: #{_xyz_pallas.1} parent=0 // pred_check
    _
  $region7: #{_xyz_pallas.1} parent=0 // pred_check_branch
    %107 = sbr.rel (0) target = $region9
  $region8: #{_xyz_pallas.1} parent=0 // pred_region
    _
  $region9: #{_xyz_pallas.1} parent=0 // pred_fallthru
    _
  // Predicated region
  $region10: #{_xyz_pallas.1} parent=0 // pred_check
    _
  $region11: #{_xyz_pallas.1} parent=0 // pred_check_branch
    %109 = sbr.rel (0) target = $region13
  $region12: #{_xyz_pallas.1} parent=0 // pred_region
    _
  $region13: #{_xyz_pallas.1} parent=0 // pred_fallthru
    _

</llo_original>
